<compile_context>
chip_gen: v7x
topology: tpu7x:2x2x1
jax: 0.10.0
libtpu: 0.0.40
codegen_flags: <defaults>
</compile_context>

<pallas_src>
import functools

import jax
import jax.numpy as jnp
from jax.experimental import pallas as pl
from jax.experimental.pallas import tpu as pltpu


def _round_up(x: int, m: int) -> int:
    return ((x + m - 1) // m) * m


def _vmem_limit_bytes() -> int:
    """Generation-aware VMEM budget (3/4 of physical), 32 MiB fallback."""
    default = 32 * 1024 * 1024
    try:
        info = pltpu.get_tpu_info()
        cap = getattr(info, "vmem_capacity_bytes", None)
    except Exception:
        return default
    if not cap:
        return default
    return int(min(int(cap), 128 * 1024 * 1024) * 3 // 4)


def mlp_kernel(x_ref, w1_ref, b1_ref, w2_ref, b2_ref, o_ref):
    # Two MXU matmuls with f32 accumulation; bias adds run on the VPU under the MXU,
    # tanh goes to the EUP. Everything needed for this grid step is resident in VMEM.
    h = jnp.dot(x_ref[...], w1_ref[...], preferred_element_type=jnp.float32)
    h = jnp.tanh(h + b1_ref[...])
    out = jnp.dot(h.astype(w2_ref.dtype), w2_ref[...], preferred_element_type=jnp.float32)
    o_ref[...] = (out + b2_ref[...]).astype(o_ref.dtype)


def pad_mlp_params(w1, b1, w2, b2, param_dtype=None):
    """Zero-pad parameters to lane-dense shapes (multiples of 128). Call ONCE at init.

    Padding is exact: padded K-columns contribute 0, padded hidden units are
    tanh(0 + 0) = 0 against zero rows of W2, padded output columns are sliced off.
    `param_dtype=jnp.bfloat16` halves weight HBM/VMEM and speeds the MXU on v6e/v7x.
    """
    d_in, d_hid = w1.shape
    d_out = w2.shape[1]
    b1 = b1.reshape(1, d_hid)
    b2 = b2.reshape(1, d_out)
    d_in_p, d_hid_p, d_out_p = (_round_up(d, 128) for d in (d_in, d_hid, d_out))
    w_dtype = w1.dtype if param_dtype is None else param_dtype

    def pad2(a, rows, cols, dtype):
        if a.shape == (rows, cols) and a.dtype == jnp.dtype(dtype):
            return a  # already aligned: no copy
        return jnp.zeros((rows, cols), dtype).at[: a.shape[0], : a.shape[1]].set(
            a.astype(dtype))

    w1_p = pad2(w1, d_in_p, d_hid_p, w_dtype)
    w2_p = pad2(w2, d_hid_p, d_out_p, w_dtype)
    # Biases stay f32: they are added to the f32 MXU accumulator.
    b1_p = pad2(b1, 1, d_hid_p, jnp.float32)
    b2_p = pad2(b2, 1, d_out_p, jnp.float32)
    return w1_p, b1_p, w2_p, b2_p


@functools.partial(jax.jit,
                   static_argnames=("d_out", "tile_b", "single_buffer_weights"))
def _mlp_forward_impl(x, w1_p, b1_p, w2_p, b2_p, *, d_out, tile_b,
                      single_buffer_weights):
    B, d_in = x.shape
    d_in_p, d_hid_p = w1_p.shape
    d_out_p = w2_p.shape[1]

    # --- batch tiling: sublane aligned; >=2 tiles when possible (v7x megacore) ---
    b_aligned = _round_up(B, 8)
    tb_cap = _round_up(pl.cdiv(b_aligned, 2), 8) if b_aligned >= 16 else b_aligned
    tb = _round_up(max(8, min(tile_b, tb_cap)), 8)
    b_p = _round_up(b_aligned, tb)
    n_tiles = b_p // tb

    # --- pad/cast activations only when needed (static check) ---
    op_dtype = w1_p.dtype
    if (b_p, d_in_p) != (B, d_in):
        x_p = jnp.zeros((b_p, d_in_p), op_dtype).at[:B, :d_in].set(x.astype(op_dtype))
    else:
        x_p = x.astype(op_dtype)

    vmem_limit = _vmem_limit_bytes()

    # Resident-weight footprint guard.
    itemsize = jnp.dtype(op_dtype).itemsize
    w_bufs = 1 if single_buffer_weights else 2
    resident = w_bufs * (itemsize * (d_in_p * d_hid_p + d_hid_p * d_out_p)
                         + 4 * (d_hid_p + d_out_p))
    if resident > vmem_limit // 2:
        # TODO(synk): add a K/N-tiled grid ('arbitrary' reduction axis + VMEM f32
        # accumulator with pl.when init/finalize) for weights too large to keep resident.
        raise NotImplementedError("MLP weights too large to keep VMEM-resident; "
                                  "K/N-tiled path not implemented.")

    if single_buffer_weights:
        def w_spec(shape):
            return pl.BlockSpec(shape, lambda i: (0, 0), pipeline_mode=pl.Buffered(1))
    else:
        def w_spec(shape):
            return pl.BlockSpec(shape, lambda i: (0, 0))

    flops = 2 * b_p * (d_in_p * d_hid_p + d_hid_p * d_out_p)
    bytes_accessed = (itemsize * (b_p * d_in_p + d_in_p * d_hid_p + d_hid_p * d_out_p)
                      + 4 * (d_hid_p + d_out_p)
                      + x.dtype.itemsize * b_p * d_out_p)

    out_p = pl.pallas_call(
        mlp_kernel,
        out_shape=jax.ShapeDtypeStruct((b_p, d_out_p), x.dtype),
        grid=(n_tiles,),
        in_specs=[
            # activations: one (tb, d_in_p) tile per grid step (auto double-buffered)
            pl.BlockSpec((tb, d_in_p), lambda i: (i, 0)),
            # weights / biases: constant block index -> resident across the grid
            w_spec((d_in_p, d_hid_p)),
            w_spec((1, d_hid_p)),
            w_spec((d_hid_p, d_out_p)),
            w_spec((1, d_out_p)),
        ],
        out_specs=pl.BlockSpec((tb, d_out_p), lambda i: (i, 0)),
        compiler_params=pltpu.CompilerParams(
            dimension_semantics=("parallel",),
            vmem_limit_bytes=vmem_limit,
        ),
        cost_estimate=pl.CostEstimate(
            flops=flops,
            transcendentals=b_p * d_hid_p,
            bytes_accessed=bytes_accessed,
        ),
    )(x_p, w1_p, b1_p, w2_p, b2_p)

    return out_p[:B, :d_out]


_SINGLE_BUFFER_WEIGHTS_OK = True


def mlp_forward_padded(x, padded_params, *, d_out, tile_b=512):
    """Forward with pre-padded params from pad_mlp_params(). Eval-mode dropout == identity."""
    global _SINGLE_BUFFER_WEIGHTS_OK
    if _SINGLE_BUFFER_WEIGHTS_OK:
        try:
            return _mlp_forward_impl(x, *padded_params, d_out=d_out, tile_b=tile_b,
                                     single_buffer_weights=True)
        except NotImplementedError:
            raise
        except Exception:
            # pipeline_mode=pl.Buffered(1) unsupported on this jax/libtpu combo;
            # fall back to default double-buffered weight blocks.
            _SINGLE_BUFFER_WEIGHTS_OK = False
    return _mlp_forward_impl(x, *padded_params, d_out=d_out, tile_b=tile_b,
                             single_buffer_weights=False)


def mlp_forward(x, w1, b1, w2, b2, *, tile_b=512, param_dtype=None):
    """One-shot convenience (re-pads params every call). For repeated calls, use
    pad_mlp_params() once + mlp_forward_padded()."""
    params = pad_mlp_params(w1, b1, w2, b2, param_dtype=param_dtype)
    return mlp_forward_padded(x, params, d_out=w2.shape[1], tile_b=tile_b)


if __name__ == "__main__":
    # MLP(input_dim=32, hidden_dim=64, output_dim=16, dropout_rate=0.1), batch=8
    batch, input_dim, hidden_dim, output_dim = 8, 32, 64, 16

    key = jax.random.PRNGKey(0)
    kx, kw1, kb1, kw2, kb2 = jax.random.split(key, 5)

    x = jax.random.normal(kx, (batch, input_dim), dtype=jnp.float32)
    # deterministic "Linear" parameter init (Kaiming-uniform-ish scale)
    w1 = jax.random.uniform(kw1, (input_dim, hidden_dim), dtype=jnp.float32,
                            minval=-1.0, maxval=1.0) / jnp.sqrt(input_dim)
    b1 = jax.random.uniform(kb1, (1, hidden_dim), dtype=jnp.float32,
                            minval=-1.0, maxval=1.0) / jnp.sqrt(input_dim)
    w2 = jax.random.uniform(kw2, (hidden_dim, output_dim), dtype=jnp.float32,
                            minval=-1.0, maxval=1.0) / jnp.sqrt(hidden_dim)
    b2 = jax.random.uniform(kb2, (1, output_dim), dtype=jnp.float32,
                            minval=-1.0, maxval=1.0) / jnp.sqrt(hidden_dim)

    # Pad parameters ONCE (hoisted out of the per-call path), then run the forward.
    padded = pad_mlp_params(w1, b1, w2, b2)          # param_dtype=jnp.bfloat16 on v6e/v7x when MXU-bound
    out = mlp_forward_padded(x, padded, d_out=output_dim)
    jax.block_until_ready(out)

    # correctness check against pure-JAX reference (eval-mode dropout == identity)
    ref = jnp.tanh(x @ w1 + b1) @ w2 + b2
    assert out.shape == (batch, output_dim)
    assert jnp.allclose(out, ref, atol=1e-5, rtol=1e-5)

    print("KERNEL_OK")
</pallas_src>

<mosaic_0001>
module attributes {stable_mosaic.version = 11 : i64} {
  func.func @mlp_kernel(%arg0: i32, %arg1: memref<8x128xf32, #tpu.memory_space<vmem>>, %arg2: memref<128x128xf32, #tpu.memory_space<vmem>>, %arg3: memref<1x128xf32, #tpu.memory_space<vmem>>, %arg4: memref<128x128xf32, #tpu.memory_space<vmem>>, %arg5: memref<1x128xf32, #tpu.memory_space<vmem>>, %arg6: memref<8x128xf32, #tpu.memory_space<vmem>>) attributes {dimension_semantics = [#tpu.dimension_semantics<parallel>], iteration_bounds = array<i64: 1>, scalar_prefetch = 0 : i64, scratch_operands = 0 : i64, tpu.core_type = #tpu.core_type<tc>, window_params = [{transform_indices = @transform_0, window_bounds = array<i64: 8, 128>}, {pipeline_mode = #tpu.pipeline_mode<synchronous>, transform_indices = @transform_1, window_bounds = array<i64: 128, 128>}, {pipeline_mode = #tpu.pipeline_mode<synchronous>, transform_indices = @transform_2, window_bounds = array<i64: 1, 128>}, {pipeline_mode = #tpu.pipeline_mode<synchronous>, transform_indices = @transform_3, window_bounds = array<i64: 128, 128>}, {pipeline_mode = #tpu.pipeline_mode<synchronous>, transform_indices = @transform_4, window_bounds = array<i64: 1, 128>}, {transform_indices = @transform_5, window_bounds = array<i64: 8, 128>}]} {
    %c0 = arith.constant 0 : index
    %c0_0 = arith.constant 0 : index
    %0 = vector.load %arg1[%c0, %c0_0] : memref<8x128xf32, #tpu.memory_space<vmem>>, vector<8x128xf32>
    %c0_1 = arith.constant 0 : index
    %c0_2 = arith.constant 0 : index
    %1 = vector.load %arg2[%c0_1, %c0_2] : memref<128x128xf32, #tpu.memory_space<vmem>>, vector<128x128xf32>
    %cst = arith.constant dense<0.000000e+00> : vector<8x128xf32>
    %2 = tpu.matmul %0, %1, %cst {dimension_numbers = #tpu.dot_dimension_numbers<[1], [0], [0], [1], [0, 0, 1, 1], [], []>} : vector<8x128xf32>, vector<128x128xf32>, vector<8x128xf32> -> vector<8x128xf32>
    %c0_3 = arith.constant 0 : index
    %c0_4 = arith.constant 0 : index
    %3 = vector.load %arg3[%c0_3, %c0_4] : memref<1x128xf32, #tpu.memory_space<vmem>>, vector<1x128xf32>
    %4 = vector.broadcast %3 : vector<1x128xf32> to vector<8x128xf32>
    %5 = arith.addf %2, %4 : vector<8x128xf32>
    %6 = math.tanh %5 : vector<8x128xf32>
    %c0_5 = arith.constant 0 : index
    %c0_6 = arith.constant 0 : index
    %7 = vector.load %arg4[%c0_5, %c0_6] : memref<128x128xf32, #tpu.memory_space<vmem>>, vector<128x128xf32>
    %cst_7 = arith.constant dense<0.000000e+00> : vector<8x128xf32>
    %8 = tpu.matmul %6, %7, %cst_7 {dimension_numbers = #tpu.dot_dimension_numbers<[1], [0], [0], [1], [0, 0, 1, 1], [], []>} : vector<8x128xf32>, vector<128x128xf32>, vector<8x128xf32> -> vector<8x128xf32>
    %c0_8 = arith.constant 0 : index
    %c0_9 = arith.constant 0 : index
    %9 = vector.load %arg5[%c0_8, %c0_9] : memref<1x128xf32, #tpu.memory_space<vmem>>, vector<1x128xf32>
    %10 = vector.broadcast %9 : vector<1x128xf32> to vector<8x128xf32>
    %11 = arith.addf %8, %10 : vector<8x128xf32>
    %c0_10 = arith.constant 0 : index
    %c0_11 = arith.constant 0 : index
    %12 = vector.load %arg6[%c0_10, %c0_11] : memref<8x128xf32, #tpu.memory_space<vmem>>, vector<8x128xf32>
    tpu.vector_store %arg6[%c0_10, %c0_11], %11 {strides = array<i32>} : memref<8x128xf32, #tpu.memory_space<vmem>>, vector<8x128xf32>,
    return
  }
  func.func @transform_0(%arg0: i32) -> (i32, i32) {
    %c0_i32 = arith.constant 0 : i32
    %c0_i32_0 = arith.constant 0 : i32
    return %arg0, %c0_i32 : i32, i32
  }
  func.func @transform_1(%arg0: i32) -> (i32, i32) {
    %c0_i32 = arith.constant 0 : i32
    %c0_i32_0 = arith.constant 0 : i32
    %c0_i32_1 = arith.constant 0 : i32
    return %c0_i32, %c0_i32_0 : i32, i32
  }
  func.func @transform_2(%arg0: i32) -> (i32, i32) {
    %c0_i32 = arith.constant 0 : i32
    %c0_i32_0 = arith.constant 0 : i32
    %c0_i32_1 = arith.constant 0 : i32
    return %c0_i32, %c0_i32_0 : i32, i32
  }
  func.func @transform_3(%arg0: i32) -> (i32, i32) {
    %c0_i32 = arith.constant 0 : i32
    %c0_i32_0 = arith.constant 0 : i32
    %c0_i32_1 = arith.constant 0 : i32
    return %c0_i32, %c0_i32_0 : i32, i32
  }
  func.func @transform_4(%arg0: i32) -> (i32, i32) {
    %c0_i32 = arith.constant 0 : i32
    %c0_i32_0 = arith.constant 0 : i32
    %c0_i32_1 = arith.constant 0 : i32
    return %c0_i32, %c0_i32_0 : i32, i32
  }
  func.func @transform_5(%arg0: i32) -> (i32, i32) {
    %c0_i32 = arith.constant 0 : i32
    %c0_i32_0 = arith.constant 0 : i32
    return %arg0, %c0_i32 : i32, i32
  }
}

module attributes {stable_mosaic.version = 11 : i64} {
  func.func @mlp_kernel(%arg0: i32, %arg1: memref<8x128xf32, #tpu.memory_space<vmem>>, %arg2: memref<128x128xf32, #tpu.memory_space<vmem>>, %arg3: memref<1x128xf32, #tpu.memory_space<vmem>>, %arg4: memref<128x128xf32, #tpu.memory_space<vmem>>, %arg5: memref<1x128xf32, #tpu.memory_space<vmem>>, %arg6: memref<8x128xf32, #tpu.memory_space<vmem>>) attributes {dimension_semantics = [#tpu.dimension_semantics<parallel>], iteration_bounds = array<i64: 1>, scalar_prefetch = 0 : i64, scratch_operands = 0 : i64, tpu.core_type = #tpu.core_type<tc>, window_params = [{transform_indices = @transform_0, window_bounds = array<i64: 8, 128>}, {pipeline_mode = #tpu.pipeline_mode<synchronous>, transform_indices = @transform_1, window_bounds = array<i64: 128, 128>}, {pipeline_mode = #tpu.pipeline_mode<synchronous>, transform_indices = @transform_2, window_bounds = array<i64: 1, 128>}, {pipeline_mode = #tpu.pipeline_mode<synchronous>, transform_indices = @transform_3, window_bounds = array<i64: 128, 128>}, {pipeline_mode = #tpu.pipeline_mode<synchronous>, transform_indices = @transform_4, window_bounds = array<i64: 1, 128>}, {transform_indices = @transform_5, window_bounds = array<i64: 8, 128>}]} {
    %c0 = arith.constant 0 : index
    %c0_0 = arith.constant 0 : index
    %0 = vector.load %arg1[%c0, %c0_0] : memref<8x128xf32, #tpu.memory_space<vmem>>, vector<8x128xf32>
    %c0_1 = arith.constant 0 : index
    %c0_2 = arith.constant 0 : index
    %1 = vector.load %arg2[%c0_1, %c0_2] : memref<128x128xf32, #tpu.memory_space<vmem>>, vector<128x128xf32>
    %cst = arith.constant dense<0.000000e+00> : vector<8x128xf32>
    %2 = tpu.matmul %0, %1, %cst {dimension_numbers = #tpu.dot_dimension_numbers<[1], [0], [0], [1], [0, 0, 1, 1], [], []>} : vector<8x128xf32>, vector<128x128xf32>, vector<8x128xf32> -> vector<8x128xf32>
    %c0_3 = arith.constant 0 : index
    %c0_4 = arith.constant 0 : index
    %3 = vector.load %arg3[%c0_3, %c0_4] : memref<1x128xf32, #tpu.memory_space<vmem>>, vector<1x128xf32>
    %4 = vector.broadcast %3 : vector<1x128xf32> to vector<8x128xf32>
    %5 = arith.addf %2, %4 : vector<8x128xf32>
    %6 = math.tanh %5 : vector<8x128xf32>
    %c0_5 = arith.constant 0 : index
    %c0_6 = arith.constant 0 : index
    %7 = vector.load %arg4[%c0_5, %c0_6] : memref<128x128xf32, #tpu.memory_space<vmem>>, vector<128x128xf32>
    %cst_7 = arith.constant dense<0.000000e+00> : vector<8x128xf32>
    %8 = tpu.matmul %6, %7, %cst_7 {dimension_numbers = #tpu.dot_dimension_numbers<[1], [0], [0], [1], [0, 0, 1, 1], [], []>} : vector<8x128xf32>, vector<128x128xf32>, vector<8x128xf32> -> vector<8x128xf32>
    %c0_8 = arith.constant 0 : index
    %c0_9 = arith.constant 0 : index
    %9 = vector.load %arg5[%c0_8, %c0_9] : memref<1x128xf32, #tpu.memory_space<vmem>>, vector<1x128xf32>
    %10 = vector.broadcast %9 : vector<1x128xf32> to vector<8x128xf32>
    %11 = arith.addf %8, %10 : vector<8x128xf32>
    %c0_10 = arith.constant 0 : index
    %c0_11 = arith.constant 0 : index
    %12 = vector.load %arg6[%c0_10, %c0_11] : memref<8x128xf32, #tpu.memory_space<vmem>>, vector<8x128xf32>
    tpu.vector_store %arg6[%c0_10, %c0_11], %11 {strides = array<i32>} : memref<8x128xf32, #tpu.memory_space<vmem>>, vector<8x128xf32>,
    return
  }
  func.func @transform_0(%arg0: i32) -> (i32, i32) {
    %c0_i32 = arith.constant 0 : i32
    %c0_i32_0 = arith.constant 0 : i32
    return %arg0, %c0_i32 : i32, i32
  }
  func.func @transform_1(%arg0: i32) -> (i32, i32) {
    %c0_i32 = arith.constant 0 : i32
    %c0_i32_0 = arith.constant 0 : i32
    %c0_i32_1 = arith.constant 0 : i32
    return %c0_i32, %c0_i32_0 : i32, i32
  }
  func.func @transform_2(%arg0: i32) -> (i32, i32) {
    %c0_i32 = arith.constant 0 : i32
    %c0_i32_0 = arith.constant 0 : i32
    %c0_i32_1 = arith.constant 0 : i32
    return %c0_i32, %c0_i32_0 : i32, i32
  }
  func.func @transform_3(%arg0: i32) -> (i32, i32) {
    %c0_i32 = arith.constant 0 : i32
    %c0_i32_0 = arith.constant 0 : i32
    %c0_i32_1 = arith.constant 0 : i32
    return %c0_i32, %c0_i32_0 : i32, i32
  }
  func.func @transform_4(%arg0: i32) -> (i32, i32) {
    %c0_i32 = arith.constant 0 : i32
    %c0_i32_0 = arith.constant 0 : i32
    %c0_i32_1 = arith.constant 0 : i32
    return %c0_i32, %c0_i32_0 : i32, i32
  }
  func.func @transform_5(%arg0: i32) -> (i32, i32) {
    %c0_i32 = arith.constant 0 : i32
    %c0_i32_0 = arith.constant 0 : i32
    return %arg0, %c0_i32 : i32, i32
  }
}

</mosaic_0001>

<llo_original>
// kernel: _mlp_forward_impl.1
$region0: #{_mlp_forward_impl.1}
  #allocation0 [shape = 'u32[]', space=smem, size = 0x4, offset = 0x4, fixed_abs, tag = 'smem constant byte address 0x4 - core index']
  #allocation1 [shape = 'u32[144,128]{1,0:T(1,128)}', space=vmem, size = 0x12000, scoped, tag = 'internal scratch']
  %s0 = inlined_call_operand.vmem [shape: f32[8,128], index: 0, kind: input, shape index: {}]
  %s1 = inlined_call_operand.hbm [shape: f32[128,128], index: 1, kind: input, shape index: {}]
  %s2 = inlined_call_operand.vmem [shape: f32[1,128], index: 2, kind: input, shape index: {}]
  %s3 = inlined_call_operand.hbm [shape: f32[128,128], index: 3, kind: input, shape index: {}]
  %s4 = inlined_call_operand.vmem [shape: f32[1,128], index: 4, kind: input, shape index: {}]
  %s5 = inlined_call_operand.hbm [shape: f32[8,128], index: 5, kind: output, shape index: {}]
  %s6 = sld [smem:[#allocation0]]
  $region38: #{_mlp_forward_impl.1} parent=0
    _
  %s8 = ssub.s32 1, %s6
  %s9 = scalar_select 0, %s8, %s6
  $region1: #{_mlp_forward_impl.1} parent=0
    #allocation2 [shape = 'u8[65536]{0}', space=vmem, size = 0x10000, scoped, tag = 'input window, operand 1, single buffered']
    #allocation3 [shape = 's32[1]{0}', space=sflag, size = 0x4, scoped, tag = 'scoped memory for _mlp_forward_impl.1']
    #allocation4 [shape = 's32[1]{0}', space=sflag, size = 0x4, scoped, tag = 'scoped memory for _mlp_forward_impl.1']
    #allocation5 [shape = 'u8[65536]{0}', space=vmem, size = 0x10000, scoped, tag = 'input window, operand 3, single buffered']
    #allocation6 [shape = 's32[1]{0}', space=sflag, size = 0x4, scoped, tag = 'scoped memory for _mlp_forward_impl.1']
    #allocation7 [shape = 'u8[4096]{0}', space=vmem, size = 0x1000, scoped, tag = 'output window, operand 0, single buffered']
    %10 = vsyncpa [#allocation3], 0
    %11 = vsyncpa [#allocation6], 0
    %12 = vsyncpa [#allocation4], 0
    // Predicated region
    $region2: #{_mlp_forward_impl.1} parent=1 // pred_check
      _
    $region3: #{_mlp_forward_impl.1} parent=1 // pred_check_branch
      %14 = sbr.rel (0) target = $region5
    $region4: #{_mlp_forward_impl.1} parent=1 // pred_region
      _
    $region5: #{_mlp_forward_impl.1} parent=1 // pred_fallthru
      _
    // Predicated region
    $region6: #{_mlp_forward_impl.1} parent=1 // pred_check
      _
    $region7: #{_mlp_forward_impl.1} parent=1 // pred_check_branch
      %16 = sbr.rel (0) target = $region9
    $region8: #{_mlp_forward_impl.1} parent=1 // pred_region
      %s18 = ssub.s32 2048, 2048
      %19 = vsyncadd [#allocation3], %s18
      %s20 = sshll.u32 [#allocation2], 4
      %s21 = int_to_ptr.vmem [resolvable:$true] %s20
      %26 = dma.hbm_to_vmem [thread:$0]  %s1, 2048, %s21, [#allocation3], 128, 128, 8
    $region9: #{_mlp_forward_impl.1} parent=1 // pred_fallthru
      _
    // Predicated region
    $region10: #{_mlp_forward_impl.1} parent=1 // pred_check
      _
    $region11: #{_mlp_forward_impl.1} parent=1 // pred_check_branch
      %28 = sbr.rel (0) target = $region13
    $region12: #{_mlp_forward_impl.1} parent=1 // pred_region
      _
    $region13: #{_mlp_forward_impl.1} parent=1 // pred_fallthru
      _
    // Predicated region
    $region14: #{_mlp_forward_impl.1} parent=1 // pred_check
      _
    $region15: #{_mlp_forward_impl.1} parent=1 // pred_check_branch
      %30 = sbr.rel (0) target = $region17
    $region16: #{_mlp_forward_impl.1} parent=1 // pred_region
      %s32 = ssub.s32 2048, 2048
      %33 = vsyncadd [#allocation6], %s32
      %s34 = sshll.u32 [#allocation5], 4
      %s35 = int_to_ptr.vmem [resolvable:$true] %s34
      %40 = dma.hbm_to_vmem [thread:$0]  %s3, 2048, %s35, [#allocation6], 128, 128, 8
    $region17: #{_mlp_forward_impl.1} parent=1 // pred_fallthru
      _
    // Predicated region
    $region18: #{_mlp_forward_impl.1} parent=1 // pred_check
      _
    $region19: #{_mlp_forward_impl.1} parent=1 // pred_check_branch
      %42 = sbr.rel (0) target = $region21
    $region20: #{_mlp_forward_impl.1} parent=1 // pred_region
      _
    $region21: #{_mlp_forward_impl.1} parent=1 // pred_fallthru
      _
    // Predicated region
    $region22: #{_mlp_forward_impl.1} parent=1 // pred_check
      _
    $region23: #{_mlp_forward_impl.1} parent=1 // pred_check_branch
      %44 = sbr.rel (0) target = $region25
    $region24: #{_mlp_forward_impl.1} parent=1 // pred_region
      %45 = dma.done [#allocation3], 2048
    $region25: #{_mlp_forward_impl.1} parent=1 // pred_fallthru
      _
    // Predicated region
    $region26: #{_mlp_forward_impl.1} parent=1 // pred_check
      _
    $region27: #{_mlp_forward_impl.1} parent=1 // pred_check_branch
      %47 = sbr.rel (0) target = $region29
    $region28: #{_mlp_forward_impl.1} parent=1 // pred_region
      %48 = dma.done [#allocation6], 2048
    $region29: #{_mlp_forward_impl.1} parent=1 // pred_fallthru
      _
    %v49 = vld [vmem:[%s0] sm:$0xff]
    %v50 = vld [vmem:[#allocation2] sm:$0xff]
    %v51 = vld [vmem:[#allocation2 + $0x8] sm:$0xff]
    %v52 = vld [vmem:[#allocation2 + $0x10] sm:$0xff]
    %v53 = vld [vmem:[#allocation2 + $0x18] sm:$0xff]
    %v54 = vld [vmem:[#allocation2 + $0x20] sm:$0xff]
    %v55 = vld [vmem:[#allocation2 + $0x28] sm:$0xff]
    %v56 = vld [vmem:[#allocation2 + $0x30] sm:$0xff]
    %v57 = vld [vmem:[#allocation2 + $0x38] sm:$0xff]
    %v58 = vld [vmem:[#allocation2 + $0x40] sm:$0xff]
    %v59 = vld [vmem:[#allocation2 + $0x48] sm:$0xff]
    %v60 = vld [vmem:[#allocation2 + $0x50] sm:$0xff]
    %v61 = vld [vmem:[#allocation2 + $0x58] sm:$0xff]
    %v62 = vld [vmem:[#allocation2 + $0x60] sm:$0xff]
    %v63 = vld [vmem:[#allocation2 + $0x68] sm:$0xff]
    %v64 = vld [vmem:[#allocation2 + $0x70] sm:$0xff]
    %v65 = vld [vmem:[#allocation2 + $0x78] sm:$0xff]
    %v66 = vld [vmem:[%s2] sm:$0x1]
    %v68 = vlaneseq
    %v69 = vshrl.u32 %v68, 7
    %v70 = vsub.s32 0, %v69
    %v71 = vrot.slane %v66, %v70
    %73 = vmatprep.subr.mxu0 0.0
    %74 = vmatpush1.msra.mxu0 %v50
    %75 = vmatprep.subr.mxu0 0.0
    %76 = vmatpush1.msra.mxu0 %v51
    %77 = vmatprep.subr.mxu0 0.0
    %78 = vmatpush1.msra.mxu0 %v52
    %79 = vmatprep.subr.mxu0 0.0
    %80 = vmatpush1.msra.mxu0 %v53
    %81 = vmatprep.subr.mxu0 0.0
    %82 = vmatpush1.msra.mxu0 %v54
    %83 = vmatprep.subr.mxu0 0.0
    %84 = vmatpush1.msra.mxu0 %v55
    %85 = vmatprep.subr.mxu0 0.0
    %86 = vmatpush1.msra.mxu0 %v56
    %87 = vmatprep.subr.mxu0 0.0
    %88 = vmatpush1.msra.mxu0 %v57
    %89 = vmatprep.subr.mxu0 0.0
    %90 = vmatpush1.msra.mxu0 %v58
    %91 = vmatprep.subr.mxu0 0.0
    %92 = vmatpush1.msra.mxu0 %v59
    %93 = vmatprep.subr.mxu0 0.0
    %94 = vmatpush1.msra.mxu0 %v60
    %95 = vmatprep.subr.mxu0 0.0
    %96 = vmatpush1.msra.mxu0 %v61
    %97 = vmatprep.subr.mxu0 0.0
    %98 = vmatpush1.msra.mxu0 %v62
    %99 = vmatprep.subr.mxu0 0.0
    %100 = vmatpush1.msra.mxu0 %v63
    %101 = vmatprep.subr.mxu0 0.0
    %102 = vmatpush1.msra.mxu0 %v64
    %103 = vmatprep.subr.mxu0 0.0
    %104 = vmatpush1.msra.mxu0 %v65
    %105 = vmatprep.subr.mxu0 0.0
    %106 = vmatpush1.msra.mxu0 0.0
    %107 = vmatprep.subr.mxu0 0.0
    %108 = vmatpush1.msra.mxu0 0.0
    %109 = vmatprep.subr.mxu0 0.0
    %110 = vmatpush1.msra.mxu0 0.0
    %111 = vmatprep.subr.mxu0 0.0
    %112 = vmatpush1.msra.mxu0 0.0
    %113 = vmatprep.subr.mxu0 0.0
    %114 = vmatpush1.msra.mxu0 0.0
    %115 = vmatprep.subr.mxu0 0.0
    %116 = vmatpush1.msra.mxu0 0.0
    %117 = vmatprep.subr.mxu0 0.0
    %118 = vmatpush1.msra.mxu0 0.0
    %119 = vmatprep.subr.mxu0 0.0
    %120 = vmatpush1.msra.mxu0 0.0
    %121 = vmatprep.subr.mxu0 0.0
    %122 = vmatpush1.msra.mxu0 0.0
    %123 = vmatprep.subr.mxu0 0.0
    %124 = vmatpush1.msra.mxu0 0.0
    %125 = vmatprep.subr.mxu0 0.0
    %126 = vmatpush1.msra.mxu0 0.0
    %127 = vmatprep.subr.mxu0 0.0
    %128 = vmatpush1.msra.mxu0 0.0
    %129 = vmatprep.subr.mxu0 0.0
    %130 = vmatpush1.msra.mxu0 0.0
    %131 = vmatprep.subr.mxu0 0.0
    %132 = vmatpush1.msra.mxu0 0.0
    %133 = vmatprep.subr.mxu0 0.0
    %134 = vmatpush1.msra.mxu0 0.0
    %135 = vmatprep.subr.mxu0 0.0
    %136 = vmatpush1.msra.mxu0 0.0
    %137 = vmatprep.mubr.f32.mxu0 0.0
    %138 = vmatmul.mubr.f32.gmra.mrb[0].mxu0 %v49
    %v139 = vpop.f32.mrb[0].mxu0
    %v140 = vadd.f32 %v71, %v139
    %v141 = vpop.f32.mrb[0].mxu0
    %142 = vdwg.mxu0
    %v143 = vtanh.pop %v140
    %v144 = vld [vmem:[#allocation5] sm:$0xff]
    %v145 = vld [vmem:[#allocation5 + $0x8] sm:$0xff]
    %v146 = vld [vmem:[#allocation5 + $0x10] sm:$0xff]
    %v147 = vld [vmem:[#allocation5 + $0x18] sm:$0xff]
    %v148 = vld [vmem:[#allocation5 + $0x20] sm:$0xff]
    %v149 = vld [vmem:[#allocation5 + $0x28] sm:$0xff]
    %v150 = vld [vmem:[#allocation5 + $0x30] sm:$0xff]
    %v151 = vld [vmem:[#allocation5 + $0x38] sm:$0xff]
    %v152 = vld [vmem:[#allocation5 + $0x40] sm:$0xff]
    %v153 = vld [vmem:[#allocation5 + $0x48] sm:$0xff]
    %v154 = vld [vmem:[#allocation5 + $0x50] sm:$0xff]
    %v155 = vld [vmem:[#allocation5 + $0x58] sm:$0xff]
    %v156 = vld [vmem:[#allocation5 + $0x60] sm:$0xff]
    %v157 = vld [vmem:[#allocation5 + $0x68] sm:$0xff]
    %v158 = vld [vmem:[#allocation5 + $0x70] sm:$0xff]
    %v159 = vld [vmem:[#allocation5 + $0x78] sm:$0xff]
    %v160 = vld [vmem:[%s4] sm:$0x1]
    %v162 = vlaneseq
    %v163 = vshrl.u32 %v162, 7
    %v164 = vsub.s32 0, %v163
    %v165 = vrot.slane %v160, %v164
    %167 = vmatprep.subr.mxu0 0.0
    %168 = vmatpush1.msra.mxu0 %v144
    %169 = vmatprep.subr.mxu0 0.0
    %170 = vmatpush1.msra.mxu0 %v145
    %171 = vmatprep.subr.mxu0 0.0
    %172 = vmatpush1.msra.mxu0 %v146
    %173 = vmatprep.subr.mxu0 0.0
    %174 = vmatpush1.msra.mxu0 %v147
    %175 = vmatprep.subr.mxu0 0.0
    %176 = vmatpush1.msra.mxu0 %v148
    %177 = vmatprep.subr.mxu0 0.0
    %178 = vmatpush1.msra.mxu0 %v149
    %179 = vmatprep.subr.mxu0 0.0
    %180 = vmatpush1.msra.mxu0 %v150
    %181 = vmatprep.subr.mxu0 0.0
    %182 = vmatpush1.msra.mxu0 %v151
    %183 = vmatprep.subr.mxu0 0.0
    %184 = vmatpush1.msra.mxu0 %v152
    %185 = vmatprep.subr.mxu0 0.0
    %186 = vmatpush1.msra.mxu0 %v153
    %187 = vmatprep.subr.mxu0 0.0
    %188 = vmatpush1.msra.mxu0 %v154
    %189 = vmatprep.subr.mxu0 0.0
    %190 = vmatpush1.msra.mxu0 %v155
    %191 = vmatprep.subr.mxu0 0.0
    %192 = vmatpush1.msra.mxu0 %v156
    %193 = vmatprep.subr.mxu0 0.0
    %194 = vmatpush1.msra.mxu0 %v157
    %195 = vmatprep.subr.mxu0 0.0
    %196 = vmatpush1.msra.mxu0 %v158
    %197 = vmatprep.subr.mxu0 0.0
    %198 = vmatpush1.msra.mxu0 %v159
    %199 = vmatprep.subr.mxu0 0.0
    %200 = vmatpush1.msra.mxu0 0.0
    %201 = vmatprep.subr.mxu0 0.0
    %202 = vmatpush1.msra.mxu0 0.0
    %203 = vmatprep.subr.mxu0 0.0
    %204 = vmatpush1.msra.mxu0 0.0
    %205 = vmatprep.subr.mxu0 0.0
    %206 = vmatpush1.msra.mxu0 0.0
    %207 = vmatprep.subr.mxu0 0.0
    %208 = vmatpush1.msra.mxu0 0.0
    %209 = vmatprep.subr.mxu0 0.0
    %210 = vmatpush1.msra.mxu0 0.0
    %211 = vmatprep.subr.mxu0 0.0
    %212 = vmatpush1.msra.mxu0 0.0
    %213 = vmatprep.subr.mxu0 0.0
    %214 = vmatpush1.msra.mxu0 0.0
    %215 = vmatprep.subr.mxu0 0.0
    %216 = vmatpush1.msra.mxu0 0.0
    %217 = vmatprep.subr.mxu0 0.0
    %218 = vmatpush1.msra.mxu0 0.0
    %219 = vmatprep.subr.mxu0 0.0
    %220 = vmatpush1.msra.mxu0 0.0
    %221 = vmatprep.subr.mxu0 0.0
    %222 = vmatpush1.msra.mxu0 0.0
    %223 = vmatprep.subr.mxu0 0.0
    %224 = vmatpush1.msra.mxu0 0.0
    %225 = vmatprep.subr.mxu0 0.0
    %226 = vmatpush1.msra.mxu0 0.0
    %227 = vmatprep.subr.mxu0 0.0
    %228 = vmatpush1.msra.mxu0 0.0
    %229 = vmatprep.subr.mxu0 0.0
    %230 = vmatpush1.msra.mxu0 0.0
    %231 = vmatprep.mubr.f32.mxu0 0.0
    %232 = vmatmul.mubr.f32.gmra.mrb[0].mxu0 %v143
    %v233 = vpop.f32.mrb[0].mxu0
    %v234 = vadd.f32 %v165, %v233
    %v235 = vpop.f32.mrb[0].mxu0
    %236 = vdwg.mxu0
    %237 = vst [vmem:[#allocation7] sm:$0xff] %v234
    // Predicated region
    $region30: #{_mlp_forward_impl.1} parent=1 // pred_check
      _
    $region31: #{_mlp_forward_impl.1} parent=1 // pred_check_branch
      %239 = sbr.rel (0) target = $region33
    $region32: #{_mlp_forward_impl.1} parent=1 // pred_region
      %s241 = ssub.s32 128, 128
      %242 = vsyncadd [#allocation4], %s241
      %s244 = sshll.u32 [#allocation7], 4
      %s245 = int_to_ptr.vmem [resolvable:$true] %s244
      %247 = dma.vmem_to_hbm [thread:$0]  %s245, 128, %s5, [#allocation4]
    $region33: #{_mlp_forward_impl.1} parent=1 // pred_fallthru
      _
    // Predicated region
    $region34: #{_mlp_forward_impl.1} parent=1 // pred_check
      _
    $region35: #{_mlp_forward_impl.1} parent=1 // pred_check_branch
      %249 = sbr.rel (0) target = $region37
    $region36: #{_mlp_forward_impl.1} parent=1 // pred_region
      %250 = dma.done [#allocation4], 128
    $region37: #{_mlp_forward_impl.1} parent=1 // pred_fallthru
      _
    %251 = vsyncpa [#allocation3], 1
    %252 = vsyncpa [#allocation6], 1
    %253 = vsyncpa [#allocation4], 1

// kernel: _mlp_forward_impl.1
$region0: #{_mlp_forward_impl.1}
  #allocation0 [shape = 'u32[]', space=smem, size = 0x4, offset = 0x4, fixed_abs, tag = 'smem constant byte address 0x4 - core index']
  #allocation1 [shape = 'u32[144,128]{1,0:T(1,128)}', space=vmem, size = 0x12000, scoped, tag = 'internal scratch']
  %s0 = inlined_call_operand.vmem [shape: f32[8,128], index: 0, kind: input, shape index: {}]
  %s1 = inlined_call_operand.hbm [shape: f32[128,128], index: 1, kind: input, shape index: {}]
  %s2 = inlined_call_operand.vmem [shape: f32[1,128], index: 2, kind: input, shape index: {}]
  %s3 = inlined_call_operand.hbm [shape: f32[128,128], index: 3, kind: input, shape index: {}]
  %s4 = inlined_call_operand.vmem [shape: f32[1,128], index: 4, kind: input, shape index: {}]
  %s5 = inlined_call_operand.hbm [shape: f32[8,128], index: 5, kind: output, shape index: {}]
  %s6 = sld [smem:[#allocation0]]
  $region38: #{_mlp_forward_impl.1} parent=0
    _
  %s8 = ssub.s32 1, %s6
  %s9 = scalar_select 0, %s8, %s6
  $region1: #{_mlp_forward_impl.1} parent=0
    #allocation2 [shape = 'u8[65536]{0}', space=vmem, size = 0x10000, scoped, tag = 'input window, operand 1, single buffered']
    #allocation3 [shape = 's32[1]{0}', space=sflag, size = 0x4, scoped, tag = 'scoped memory for _mlp_forward_impl.1']
    #allocation4 [shape = 's32[1]{0}', space=sflag, size = 0x4, scoped, tag = 'scoped memory for _mlp_forward_impl.1']
    #allocation5 [shape = 'u8[65536]{0}', space=vmem, size = 0x10000, scoped, tag = 'input window, operand 3, single buffered']
    #allocation6 [shape = 's32[1]{0}', space=sflag, size = 0x4, scoped, tag = 'scoped memory for _mlp_forward_impl.1']
    #allocation7 [shape = 'u8[4096]{0}', space=vmem, size = 0x1000, scoped, tag = 'output window, operand 0, single buffered']
    %10 = vsyncpa [#allocation3], 0
    %11 = vsyncpa [#allocation6], 0
    %12 = vsyncpa [#allocation4], 0
    // Predicated region
    $region2: #{_mlp_forward_impl.1} parent=1 // pred_check
      _
    $region3: #{_mlp_forward_impl.1} parent=1 // pred_check_branch
      %14 = sbr.rel (0) target = $region5
    $region4: #{_mlp_forward_impl.1} parent=1 // pred_region
      _
    $region5: #{_mlp_forward_impl.1} parent=1 // pred_fallthru
      _
    // Predicated region
    $region6: #{_mlp_forward_impl.1} parent=1 // pred_check
      _
    $region7: #{_mlp_forward_impl.1} parent=1 // pred_check_branch
      %16 = sbr.rel (0) target = $region9
    $region8: #{_mlp_forward_impl.1} parent=1 // pred_region
      %s18 = ssub.s32 2048, 2048
      %19 = vsyncadd [#allocation3], %s18
      %s20 = sshll.u32 [#allocation2], 4
      %s21 = int_to_ptr.vmem [resolvable:$true] %s20
      %26 = dma.hbm_to_vmem [thread:$0]  %s1, 2048, %s21, [#allocation3], 128, 128, 8
    $region9: #{_mlp_forward_impl.1} parent=1 // pred_fallthru
      _
    // Predicated region
    $region10: #{_mlp_forward_impl.1} parent=1 // pred_check
      _
    $region11: #{_mlp_forward_impl.1} parent=1 // pred_check_branch
      %28 = sbr.rel (0) target = $region13
    $region12: #{_mlp_forward_impl.1} parent=1 // pred_region
      _
    $region13: #{_mlp_forward_impl.1} parent=1 // pred_fallthru
      _
    // Predicated region
    $region14: #{_mlp_forward_impl.1} parent=1 // pred_check
      _
    $region15: #{_mlp_forward_impl.1} parent=1 // pred_check_branch
      %30 = sbr.rel (0) target = $region17
    $region16: #{_mlp_forward_impl.1} parent=1 // pred_region
      %s32 = ssub.s32 2048, 2048
      %33 = vsyncadd [#allocation6], %s32
      %s34 = sshll.u32 [#allocation5], 4
      %s35 = int_to_ptr.vmem [resolvable:$true] %s34
      %40 = dma.hbm_to_vmem [thread:$0]  %s3, 2048, %s35, [#allocation6], 128, 128, 8
    $region17: #{_mlp_forward_impl.1} parent=1 // pred_fallthru
      _
    // Predicated region
    $region18: #{_mlp_forward_impl.1} parent=1 // pred_check
      _
    $region19: #{_mlp_forward_impl.1} parent=1 // pred_check_branch
      %42 = sbr.rel (0) target = $region21
    $region20: #{_mlp_forward_impl.1} parent=1 // pred_region
      _
    $region21: #{_mlp_forward_impl.1} parent=1 // pred_fallthru
      _
    // Predicated region
    $region22: #{_mlp_forward_impl.1} parent=1 // pred_check
      _
    $region23: #{_mlp_forward_impl.1} parent=1 // pred_check_branch
      %44 = sbr.rel (0) target = $region25
    $region24: #{_mlp_forward_impl.1} parent=1 // pred_region
      %45 = dma.done [#allocation3], 2048
    $region25: #{_mlp_forward_impl.1} parent=1 // pred_fallthru
      _
    // Predicated region
    $region26: #{_mlp_forward_impl.1} parent=1 // pred_check
      _
    $region27: #{_mlp_forward_impl.1} parent=1 // pred_check_branch
      %47 = sbr.rel (0) target = $region29
    $region28: #{_mlp_forward_impl.1} parent=1 // pred_region
      %48 = dma.done [#allocation6], 2048
    $region29: #{_mlp_forward_impl.1} parent=1 // pred_fallthru
      _
    %v49 = vld [vmem:[%s0] sm:$0xff]
    %v50 = vld [vmem:[#allocation2] sm:$0xff]
    %v51 = vld [vmem:[#allocation2 + $0x8] sm:$0xff]
    %v52 = vld [vmem:[#allocation2 + $0x10] sm:$0xff]
    %v53 = vld [vmem:[#allocation2 + $0x18] sm:$0xff]
    %v54 = vld [vmem:[#allocation2 + $0x20] sm:$0xff]
    %v55 = vld [vmem:[#allocation2 + $0x28] sm:$0xff]
    %v56 = vld [vmem:[#allocation2 + $0x30] sm:$0xff]
    %v57 = vld [vmem:[#allocation2 + $0x38] sm:$0xff]
    %v58 = vld [vmem:[#allocation2 + $0x40] sm:$0xff]
    %v59 = vld [vmem:[#allocation2 + $0x48] sm:$0xff]
    %v60 = vld [vmem:[#allocation2 + $0x50] sm:$0xff]
    %v61 = vld [vmem:[#allocation2 + $0x58] sm:$0xff]
    %v62 = vld [vmem:[#allocation2 + $0x60] sm:$0xff]
    %v63 = vld [vmem:[#allocation2 + $0x68] sm:$0xff]
    %v64 = vld [vmem:[#allocation2 + $0x70] sm:$0xff]
    %v65 = vld [vmem:[#allocation2 + $0x78] sm:$0xff]
    %v66 = vld [vmem:[%s2] sm:$0x1]
    %v68 = vlaneseq
    %v69 = vshrl.u32 %v68, 7
    %v70 = vsub.s32 0, %v69
    %v71 = vrot.slane %v66, %v70
    %73 = vmatprep.subr.mxu0 0.0
    %74 = vmatpush1.msra.mxu0 %v50
    %75 = vmatprep.subr.mxu0 0.0
    %76 = vmatpush1.msra.mxu0 %v51
    %77 = vmatprep.subr.mxu0 0.0
    %78 = vmatpush1.msra.mxu0 %v52
    %79 = vmatprep.subr.mxu0 0.0
    %80 = vmatpush1.msra.mxu0 %v53
    %81 = vmatprep.subr.mxu0 0.0
    %82 = vmatpush1.msra.mxu0 %v54
    %83 = vmatprep.subr.mxu0 0.0
    %84 = vmatpush1.msra.mxu0 %v55
    %85 = vmatprep.subr.mxu0 0.0
    %86 = vmatpush1.msra.mxu0 %v56
    %87 = vmatprep.subr.mxu0 0.0
    %88 = vmatpush1.msra.mxu0 %v57
    %89 = vmatprep.subr.mxu0 0.0
    %90 = vmatpush1.msra.mxu0 %v58
    %91 = vmatprep.subr.mxu0 0.0
    %92 = vmatpush1.msra.mxu0 %v59
    %93 = vmatprep.subr.mxu0 0.0
    %94 = vmatpush1.msra.mxu0 %v60
    %95 = vmatprep.subr.mxu0 0.0
    %96 = vmatpush1.msra.mxu0 %v61
    %97 = vmatprep.subr.mxu0 0.0
    %98 = vmatpush1.msra.mxu0 %v62
    %99 = vmatprep.subr.mxu0 0.0
    %100 = vmatpush1.msra.mxu0 %v63
    %101 = vmatprep.subr.mxu0 0.0
    %102 = vmatpush1.msra.mxu0 %v64
    %103 = vmatprep.subr.mxu0 0.0
    %104 = vmatpush1.msra.mxu0 %v65
    %105 = vmatprep.subr.mxu0 0.0
    %106 = vmatpush1.msra.mxu0 0.0
    %107 = vmatprep.subr.mxu0 0.0
    %108 = vmatpush1.msra.mxu0 0.0
    %109 = vmatprep.subr.mxu0 0.0
    %110 = vmatpush1.msra.mxu0 0.0
    %111 = vmatprep.subr.mxu0 0.0
    %112 = vmatpush1.msra.mxu0 0.0
    %113 = vmatprep.subr.mxu0 0.0
    %114 = vmatpush1.msra.mxu0 0.0
    %115 = vmatprep.subr.mxu0 0.0
    %116 = vmatpush1.msra.mxu0 0.0
    %117 = vmatprep.subr.mxu0 0.0
    %118 = vmatpush1.msra.mxu0 0.0
    %119 = vmatprep.subr.mxu0 0.0
    %120 = vmatpush1.msra.mxu0 0.0
    %121 = vmatprep.subr.mxu0 0.0
    %122 = vmatpush1.msra.mxu0 0.0
    %123 = vmatprep.subr.mxu0 0.0
    %124 = vmatpush1.msra.mxu0 0.0
    %125 = vmatprep.subr.mxu0 0.0
    %126 = vmatpush1.msra.mxu0 0.0
    %127 = vmatprep.subr.mxu0 0.0
    %128 = vmatpush1.msra.mxu0 0.0
    %129 = vmatprep.subr.mxu0 0.0
    %130 = vmatpush1.msra.mxu0 0.0
    %131 = vmatprep.subr.mxu0 0.0
    %132 = vmatpush1.msra.mxu0 0.0
    %133 = vmatprep.subr.mxu0 0.0
    %134 = vmatpush1.msra.mxu0 0.0
    %135 = vmatprep.subr.mxu0 0.0
    %136 = vmatpush1.msra.mxu0 0.0
    %137 = vmatprep.mubr.f32.mxu0 0.0
    %138 = vmatmul.mubr.f32.gmra.mrb[0].mxu0 %v49
    %v139 = vpop.f32.mrb[0].mxu0
    %v140 = vadd.f32 %v71, %v139
    %v141 = vpop.f32.mrb[0].mxu0
    %142 = vdwg.mxu0
    %v143 = vtanh.pop %v140
    %v144 = vld [vmem:[#allocation5] sm:$0xff]
    %v145 = vld [vmem:[#allocation5 + $0x8] sm:$0xff]
    %v146 = vld [vmem:[#allocation5 + $0x10] sm:$0xff]
    %v147 = vld [vmem:[#allocation5 + $0x18] sm:$0xff]
    %v148 = vld [vmem:[#allocation5 + $0x20] sm:$0xff]
    %v149 = vld [vmem:[#allocation5 + $0x28] sm:$0xff]
    %v150 = vld [vmem:[#allocation5 + $0x30] sm:$0xff]
    %v151 = vld [vmem:[#allocation5 + $0x38] sm:$0xff]
    %v152 = vld [vmem:[#allocation5 + $0x40] sm:$0xff]
    %v153 = vld [vmem:[#allocation5 + $0x48] sm:$0xff]
    %v154 = vld [vmem:[#allocation5 + $0x50] sm:$0xff]
    %v155 = vld [vmem:[#allocation5 + $0x58] sm:$0xff]
    %v156 = vld [vmem:[#allocation5 + $0x60] sm:$0xff]
    %v157 = vld [vmem:[#allocation5 + $0x68] sm:$0xff]
    %v158 = vld [vmem:[#allocation5 + $0x70] sm:$0xff]
    %v159 = vld [vmem:[#allocation5 + $0x78] sm:$0xff]
    %v160 = vld [vmem:[%s4] sm:$0x1]
    %v162 = vlaneseq
    %v163 = vshrl.u32 %v162, 7
    %v164 = vsub.s32 0, %v163
    %v165 = vrot.slane %v160, %v164
    %167 = vmatprep.subr.mxu0 0.0
    %168 = vmatpush1.msra.mxu0 %v144
    %169 = vmatprep.subr.mxu0 0.0
    %170 = vmatpush1.msra.mxu0 %v145
    %171 = vmatprep.subr.mxu0 0.0
    %172 = vmatpush1.msra.mxu0 %v146
    %173 = vmatprep.subr.mxu0 0.0
    %174 = vmatpush1.msra.mxu0 %v147
    %175 = vmatprep.subr.mxu0 0.0
    %176 = vmatpush1.msra.mxu0 %v148
    %177 = vmatprep.subr.mxu0 0.0
    %178 = vmatpush1.msra.mxu0 %v149
    %179 = vmatprep.subr.mxu0 0.0
    %180 = vmatpush1.msra.mxu0 %v150
    %181 = vmatprep.subr.mxu0 0.0
    %182 = vmatpush1.msra.mxu0 %v151
    %183 = vmatprep.subr.mxu0 0.0
    %184 = vmatpush1.msra.mxu0 %v152
    %185 = vmatprep.subr.mxu0 0.0
    %186 = vmatpush1.msra.mxu0 %v153
    %187 = vmatprep.subr.mxu0 0.0
    %188 = vmatpush1.msra.mxu0 %v154
    %189 = vmatprep.subr.mxu0 0.0
    %190 = vmatpush1.msra.mxu0 %v155
    %191 = vmatprep.subr.mxu0 0.0
    %192 = vmatpush1.msra.mxu0 %v156
    %193 = vmatprep.subr.mxu0 0.0
    %194 = vmatpush1.msra.mxu0 %v157
    %195 = vmatprep.subr.mxu0 0.0
    %196 = vmatpush1.msra.mxu0 %v158
    %197 = vmatprep.subr.mxu0 0.0
    %198 = vmatpush1.msra.mxu0 %v159
    %199 = vmatprep.subr.mxu0 0.0
    %200 = vmatpush1.msra.mxu0 0.0
    %201 = vmatprep.subr.mxu0 0.0
    %202 = vmatpush1.msra.mxu0 0.0
    %203 = vmatprep.subr.mxu0 0.0
    %204 = vmatpush1.msra.mxu0 0.0
    %205 = vmatprep.subr.mxu0 0.0
    %206 = vmatpush1.msra.mxu0 0.0
    %207 = vmatprep.subr.mxu0 0.0
    %208 = vmatpush1.msra.mxu0 0.0
    %209 = vmatprep.subr.mxu0 0.0
    %210 = vmatpush1.msra.mxu0 0.0
    %211 = vmatprep.subr.mxu0 0.0
    %212 = vmatpush1.msra.mxu0 0.0
    %213 = vmatprep.subr.mxu0 0.0
    %214 = vmatpush1.msra.mxu0 0.0
    %215 = vmatprep.subr.mxu0 0.0
    %216 = vmatpush1.msra.mxu0 0.0
    %217 = vmatprep.subr.mxu0 0.0
    %218 = vmatpush1.msra.mxu0 0.0
    %219 = vmatprep.subr.mxu0 0.0
    %220 = vmatpush1.msra.mxu0 0.0
    %221 = vmatprep.subr.mxu0 0.0
    %222 = vmatpush1.msra.mxu0 0.0
    %223 = vmatprep.subr.mxu0 0.0
    %224 = vmatpush1.msra.mxu0 0.0
    %225 = vmatprep.subr.mxu0 0.0
    %226 = vmatpush1.msra.mxu0 0.0
    %227 = vmatprep.subr.mxu0 0.0
    %228 = vmatpush1.msra.mxu0 0.0
    %229 = vmatprep.subr.mxu0 0.0
    %230 = vmatpush1.msra.mxu0 0.0
    %231 = vmatprep.mubr.f32.mxu0 0.0
    %232 = vmatmul.mubr.f32.gmra.mrb[0].mxu0 %v143
    %v233 = vpop.f32.mrb[0].mxu0
    %v234 = vadd.f32 %v165, %v233
    %v235 = vpop.f32.mrb[0].mxu0
    %236 = vdwg.mxu0
    %237 = vst [vmem:[#allocation7] sm:$0xff] %v234
    // Predicated region
    $region30: #{_mlp_forward_impl.1} parent=1 // pred_check
      _
    $region31: #{_mlp_forward_impl.1} parent=1 // pred_check_branch
      %239 = sbr.rel (0) target = $region33
    $region32: #{_mlp_forward_impl.1} parent=1 // pred_region
      %s241 = ssub.s32 128, 128
      %242 = vsyncadd [#allocation4], %s241
      %s244 = sshll.u32 [#allocation7], 4
      %s245 = int_to_ptr.vmem [resolvable:$true] %s244
      %247 = dma.vmem_to_hbm [thread:$0]  %s245, 128, %s5, [#allocation4]
    $region33: #{_mlp_forward_impl.1} parent=1 // pred_fallthru
      _
    // Predicated region
    $region34: #{_mlp_forward_impl.1} parent=1 // pred_check
      _
    $region35: #{_mlp_forward_impl.1} parent=1 // pred_check_branch
      %249 = sbr.rel (0) target = $region37
    $region36: #{_mlp_forward_impl.1} parent=1 // pred_region
      %250 = dma.done [#allocation4], 128
    $region37: #{_mlp_forward_impl.1} parent=1 // pred_fallthru
      _
    %251 = vsyncpa [#allocation3], 1
    %252 = vsyncpa [#allocation6], 1
    %253 = vsyncpa [#allocation4], 1

</llo_original>
